<compile_context>
chip_gen: v7x
topology: tpu7x:2x2x1
jax: 0.10.0
libtpu: 0.0.40
codegen_flags: <defaults>
</compile_context>

<pallas_src>
import jax
import jax.numpy as jnp
from jax.experimental import pallas as pl
from jax.experimental.pallas import tpu as pltpu


def _round_up(x, m):
    return ((x + m - 1) // m) * m


def _vmem_cap_bytes():
    """Usable per-core VMEM budget (leave ~15% headroom for compiler scratch)."""
    try:
        phys = int(pltpu.get_tpu_info().vmem_capacity_bytes)
    except Exception:                       # conservative fallback (v7x per-TC size)
        phys = 64 * 1024 * 1024
    return max(32 * 1024 * 1024, int(phys * 0.85))


# ---------------------------------------------------------------------------
# Kernels
# ---------------------------------------------------------------------------
def _l_matmul_single_kernel(l_ref, y_ref, o_ref):
    """One (tm, Nk) L slab x resident Y -> (tm, Cp) output; no K axis needed."""
    o_ref[...] = jnp.dot(l_ref[...], y_ref[...],
                         preferred_element_type=jnp.float32).astype(o_ref.dtype)


def _l_matmul_ktiled_kernel(l_ref, y_ref, o_ref, acc_ref):
    """K-tiled L @ Y with a persistent f32 accumulator.

    l_ref   : (tm, tk)  tile of L        (streamed from HBM)
    y_ref   : (Nk, Cp)  whole padded Y, resident in VMEM (constant index_map)
    o_ref   : (tm, Cp)  output tile      (written on the last K step)
    acc_ref : (tm, Cp)  f32 accumulator  (carried across the K axis)
    """
    k = pl.program_id(1)
    tk = l_ref.shape[1]

    @pl.when(k == 0)
    def _init():
        acc_ref[...] = jnp.zeros_like(acc_ref)

    y_blk = y_ref[pl.ds(pl.multiple_of(k * tk, 128), tk), :]
    acc_ref[...] += jnp.dot(l_ref[...], y_blk,
                            preferred_element_type=jnp.float32)

    @pl.when(k == pl.num_programs(1) - 1)
    def _finalize():
        o_ref[...] = acc_ref[...].astype(o_ref.dtype)


# ---------------------------------------------------------------------------
# Module-style factory (mirrors the nn.Module: L and the linear weight are state)
# ---------------------------------------------------------------------------
def make_dgl_hgnn_conv(L, Wt, *, tile_m=512, tile_k=2048, use_bf16=True):
    """Build forward(X) = L @ (X @ Wt) with the propagation in a Pallas kernel.

    L  : (N, N)            dense hypergraph Laplacian (static per graph)
    Wt : (Cin, heads*Cout) transposed nn.Linear weight (no bias)
    """
    N = int(L.shape[0])
    assert L.shape == (N, N)
    Cout = int(Wt.shape[1])

    compute_dtype = jnp.bfloat16 if use_bf16 else jnp.float32
    itemsize = jnp.dtype(compute_dtype).itemsize
    row_mult = 16 if use_bf16 else 8            # sublane tile for the L stream

    # Lane-dense output slab: pad feature dim up to a multiple of 128.
    Cp = _round_up(max(Cout, 128), 128)

    # ---- Row (output) tile: large, but keep >= 2 tiles for v7x megacore. ----
    rows = _round_up(N, row_mult)
    tm = _round_up(min(tile_m, rows), row_mult)
    if tm >= rows and N >= 2 * row_mult:
        tm = _round_up((N + 1) // 2, row_mult)  # split rows so "parallel" axis can shard
    Nm = _round_up(N, tm)
    grid_m = Nm // tm

    # ---- Contraction tile: as big as the per-core VMEM budget allows. ----
    cap = _vmem_cap_bytes()

    def _footprint(tk_):
        nk_ = _round_up(N, tk_)
        y_b = 2 * nk_ * Cp * itemsize           # resident Y (counted double-buffered)
        l_b = 2 * tm * tk_ * itemsize           # double-buffered L tiles
        o_b = 2 * tm * Cp * 4                   # double-buffered f32 output tile
        a_b = tm * Cp * 4                       # f32 accumulator
        return y_b + l_b + o_b + a_b

    tk = _round_up(min(tile_k, _round_up(N, 128)), 128)
    while _footprint(tk) > cap and tk > 128:
        tk = max(128, _round_up(tk // 2, 128))
    Nk = _round_up(N, tk)
    k_steps = Nk // tk

    vmem_limit = int(min(max(_footprint(tk) * 5 // 4, 32 * 1024 * 1024), cap))

    # ---- One-time cast + pad of the static Laplacian (outside the hot path).
    # Zero padding keeps the matmul exact (padded rows/cols contribute 0).
    Lp = jnp.pad(L.astype(compute_dtype), ((0, Nm - N), (0, Nk - N)))
    Wt_f32 = jnp.asarray(Wt, jnp.float32)

    cost = pl.CostEstimate(
        flops=2 * Nm * Nk * Cp,
        transcendentals=0,
        bytes_accessed=Nm * Nk * itemsize + Nk * Cp * itemsize + Nm * Cp * 4)

    if k_steps == 1:
        # Whole contraction fits one slab: drop the K axis entirely.
        grid_spec = pltpu.PrefetchScalarGridSpec(
            num_scalar_prefetch=0,
            grid=(grid_m,),
            in_specs=[
                pl.BlockSpec((tm, Nk), lambda i: (i, 0)),    # L row slab
                pl.BlockSpec((Nk, Cp), lambda i: (0, 0)),    # resident Y
            ],
            out_specs=pl.BlockSpec((tm, Cp), lambda i: (i, 0)),
            scratch_shapes=[],
        )
        kernel = _l_matmul_single_kernel
        dim_sem = ("parallel",)
    else:
        grid_spec = pltpu.PrefetchScalarGridSpec(
            num_scalar_prefetch=0,
            grid=(grid_m, k_steps),
            in_specs=[
                pl.BlockSpec((tm, tk), lambda i, k: (i, k)),  # streamed L tiles
                pl.BlockSpec((Nk, Cp), lambda i, k: (0, 0)),  # resident Y (fetched once)
            ],
            out_specs=pl.BlockSpec((tm, Cp), lambda i, k: (i, 0)),
            scratch_shapes=[pltpu.VMEM((tm, Cp), jnp.float32)],
        )
        kernel = _l_matmul_ktiled_kernel
        dim_sem = ("parallel", "arbitrary")

    propagate = pl.pallas_call(
        kernel,
        out_shape=jax.ShapeDtypeStruct((Nm, Cp), jnp.float32),
        grid_spec=grid_spec,
        compiler_params=pltpu.CompilerParams(
            dimension_semantics=dim_sem,
            vmem_limit_bytes=vmem_limit),
        cost_estimate=cost,
    )

    @jax.jit
    def _forward(l_padded, x):
        # Tiny projection: a single XLA matmul, computed exactly once per call.
        y = jnp.dot(x, Wt_f32, preferred_element_type=jnp.float32)    # (N, Cout)
        yp = jnp.pad(y.astype(compute_dtype), ((0, Nk - N), (0, Cp - Cout)))
        out = propagate(l_padded, yp)
        return out[:N, :Cout]

    def forward(X):
        return _forward(Lp, X)

    return forward


def build_hgnn_laplacian(key, n_nodes, n_edges):
    """Deterministic synthetic HGNN Laplacian:
       L = Dv^{-1/2} H W De^{-1} H^T Dv^{-1/2}  with W = ones (as in the module)."""
    H = (jax.random.uniform(key, (n_nodes, n_edges)) > 0.5).astype(jnp.float32)
    H = H.at[:, 0].set(1.0)                    # avoid zero degrees
    H = H.at[0, :].set(1.0)
    w = jnp.ones((n_edges,), jnp.float32)      # self.W = torch.ones(E, 1)
    degV = H @ w                               # node degrees
    degE = H.sum(axis=0)                       # edge degrees
    Dv_inv_sqrt = jnp.diag(degV ** -0.5)
    De_inv = jnp.diag(1.0 / degE)
    L = Dv_inv_sqrt @ H @ jnp.diag(w) @ De_inv @ H.T @ Dv_inv_sqrt
    return L.astype(jnp.float32)


if __name__ == "__main__":
    key = jax.random.PRNGKey(0)
    k_h, k_x, k_w, k_h2, k_x2 = jax.random.split(key, 5)

    # ---- small shapes consistent with the module ----
    N, E = 64, 16
    in_channels, out_channels, heads = 16, 32, 1

    L = build_hgnn_laplacian(k_h, N, E)                          # (N, N)
    X = jax.random.normal(k_x, (N, in_channels), jnp.float32)    # (N, Cin)
    # nn.Linear(in_channels, heads*out_channels, bias=False) weight, stored transposed.
    W_lin = jax.random.normal(k_w, (heads * out_channels, in_channels),
                              jnp.float32) * (1.0 / jnp.sqrt(in_channels))
    Wt = W_lin.T                                                 # (Cin, heads*Cout)

    ref = L @ (X @ Wt)

    # f32 path (single-slab kernel; exact match against reference)
    fwd_f32 = make_dgl_hgnn_conv(L, Wt, use_bf16=False)
    out = jax.block_until_ready(fwd_f32(X))
    assert out.shape == (N, heads * out_channels)
    assert jnp.allclose(out, ref, atol=1e-4, rtol=1e-4)

    # bf16 L/Y stream (default; f32 accumulation) -> looser tolerance
    fwd_bf16 = make_dgl_hgnn_conv(L, Wt)
    out_bf16 = jax.block_until_ready(fwd_bf16(X))
    assert out_bf16.shape == (N, heads * out_channels)
    assert jnp.allclose(out_bf16, ref, atol=5e-2, rtol=5e-2)

    # K-tiled path (forced small tiles so the accumulator branch is exercised)
    N2, E2 = 384, 48
    L2 = build_hgnn_laplacian(k_h2, N2, E2)
    X2 = jax.random.normal(k_x2, (N2, in_channels), jnp.float32)
    ref2 = L2 @ (X2 @ Wt)
    fwd_kt = make_dgl_hgnn_conv(L2, Wt, tile_m=128, tile_k=128, use_bf16=False)
    out2 = jax.block_until_ready(fwd_kt(X2))
    assert out2.shape == (N2, heads * out_channels)
    assert jnp.allclose(out2, ref2, atol=1e-3, rtol=1e-3)

    print("KERNEL_OK")
</pallas_src>

<mosaic_0001>
module attributes {stable_mosaic.version = 11 : i64} {
  func.func @_l_matmul_single_kernel(%arg0: i32, %arg1: memref<32x128xf32, #tpu.memory_space<vmem>>, %arg2: memref<128x128xf32, #tpu.memory_space<vmem>>, %arg3: memref<32x128xf32, #tpu.memory_space<vmem>>) attributes {dimension_semantics = [#tpu.dimension_semantics<parallel>], iteration_bounds = array<i64: 2>, scalar_prefetch = 0 : i64, scratch_operands = 0 : i64, tpu.core_type = #tpu.core_type<tc>, window_params = [{transform_indices = @transform_0, window_bounds = array<i64: 32, 128>}, {pipeline_mode = #tpu.pipeline_mode<synchronous>, transform_indices = @transform_1, window_bounds = array<i64: 128, 128>}, {transform_indices = @transform_2, window_bounds = array<i64: 32, 128>}]} {
    %c0 = arith.constant 0 : index
    %c0_0 = arith.constant 0 : index
    %0 = vector.load %arg1[%c0, %c0_0] : memref<32x128xf32, #tpu.memory_space<vmem>>, vector<32x128xf32>
    %c0_1 = arith.constant 0 : index
    %c0_2 = arith.constant 0 : index
    %1 = vector.load %arg2[%c0_1, %c0_2] : memref<128x128xf32, #tpu.memory_space<vmem>>, vector<128x128xf32>
    %cst = arith.constant dense<0.000000e+00> : vector<32x128xf32>
    %2 = tpu.matmul %0, %1, %cst {dimension_numbers = #tpu.dot_dimension_numbers<[1], [0], [0], [1], [0, 0, 1, 1], [], []>} : vector<32x128xf32>, vector<128x128xf32>, vector<32x128xf32> -> vector<32x128xf32>
    %c0_3 = arith.constant 0 : index
    %c0_4 = arith.constant 0 : index
    %3 = vector.load %arg3[%c0_3, %c0_4] : memref<32x128xf32, #tpu.memory_space<vmem>>, vector<32x128xf32>
    tpu.vector_store %arg3[%c0_3, %c0_4], %2 {strides = array<i32>} : memref<32x128xf32, #tpu.memory_space<vmem>>, vector<32x128xf32>,
    return
  }
  func.func @transform_0(%arg0: i32) -> (i32, i32) {
    %c0_i32 = arith.constant 0 : i32
    %c0_i32_0 = arith.constant 0 : i32
    return %arg0, %c0_i32 : i32, i32
  }
  func.func @transform_1(%arg0: i32) -> (i32, i32) {
    %c0_i32 = arith.constant 0 : i32
    %c0_i32_0 = arith.constant 0 : i32
    %c0_i32_1 = arith.constant 0 : i32
    return %c0_i32, %c0_i32_0 : i32, i32
  }
  func.func @transform_2(%arg0: i32) -> (i32, i32) {
    %c0_i32 = arith.constant 0 : i32
    %c0_i32_0 = arith.constant 0 : i32
    return %arg0, %c0_i32 : i32, i32
  }
}

</mosaic_0001>

<llo_original>
// kernel: _forward.1
$region0: #{_forward.1}
  #allocation0 [shape = 'u32[]', space=smem, size = 0x4, offset = 0x4, fixed_abs, tag = 'smem constant byte address 0x4 - core index']
  #allocation1 [shape = 'u32[144,128]{1,0:T(1,128)}', space=vmem, size = 0x12000, scoped, tag = 'internal scratch']
  %s0 = inlined_call_operand.vmem [shape: f32[64,128], index: 0, kind: input, shape index: {}]
  %s1 = inlined_call_operand.vmem [shape: f32[128,128], index: 1, kind: input, shape index: {}]
  %s2 = inlined_call_operand.vmem [shape: f32[64,128], index: 2, kind: output, shape index: {}]
  %s3 = sld [smem:[#allocation0]]
  $region41: #{_forward.1} parent=0
    _
  %s5 = ssub.s32 1, %s3
  %s6 = scalar_select 0, %s5, %s3
  loop: start=0, step=1, limit=4
  $region2: #{_forward.1} parent=0 // loop_pre_header
    _
  $region3: #{_forward.1} parent=0 // loop_header
    %s8 = sphi 0, %s12
    %p9 = scmp.ge.s32.totalorder %s8, 4
    %s18 = sphi 0, %s20
    %s21 = sphi 0, %s18
    %s22 = sphi 0, %s21
    %s38 = sphi 0, %s22
    %s42 = sphi 0, %s42
    %s44 = sphi 0, %s42
    %s45 = sphi 0, %s44
    %s59 = sphi 0, %s45
    %s65 = sphi 0, %s67
    %s68 = sphi 0, %s65
    %s69 = sphi 0, %s68
    %s85 = sphi 0, %s69
  $region4: #{_forward.1} parent=0 // loop_header_branch
    %11 = sbr.rel (%p9) target = $region8
  $region5: #{_forward.1} parent=0 // loop_body
    %s13 = ssub.s32 %s8, 1
    %s14 = ssub.s32 %s8, 2
    %s15 = sadd.s32 %s8, 1
    %s16 = ssub.s32 %s8, %s15
    %p17 = scmp.eq.s32.totalorder %s16, 0
    %s19 = sadd.s32 %s18, 1
    %s20 = scalar_select %p17, %s18, %s19
    %p23 = pneg %p17
    %p24 = scmp.eq.s32.totalorder %s8, 1
    %p25 = por %p23, %p24
    %p26 = scmp.ne.s32.totalorder %s18, %s21
    %p27 = scmp.eq.s32.totalorder %s8, 0
    %p28 = por %p26, %p27
    %p29 = scmp.ne.s32.totalorder %s18, %s21
    %p30 = scmp.eq.s32.totalorder %s13, 1
    %p31 = por %p29, %p30
    %p32 = scmp.ne.s32.totalorder %s21, %s22
    %p33 = scmp.eq.s32.totalorder %s13, 0
    %p34 = por %p32, %p33
    %p35 = scmp.ne.s32.totalorder %s21, %s22
    %p36 = scmp.eq.s32.totalorder %s14, 1
    %p37 = por %p35, %p36
    %p39 = scmp.ne.s32.totalorder %s22, %s38
    %p40 = scmp.eq.s32.totalorder %s14, 0
    %p41 = por %p39, %p40
    %s43 = sadd.s32 %s42, 1
    %p46 = scmp.eq.s32.totalorder %s8, 1
    %p47 = scmp.ne.s32.totalorder %s42, %s44
    %p48 = scmp.eq.s32.totalorder %s8, 0
    %p49 = por %p47, %p48
    %p50 = scmp.ne.s32.totalorder %s42, %s44
    %p51 = scmp.eq.s32.totalorder %s13, 1
    %p52 = por %p50, %p51
    %p53 = scmp.ne.s32.totalorder %s44, %s45
    %p54 = scmp.eq.s32.totalorder %s13, 0
    %p55 = por %p53, %p54
    %p56 = scmp.ne.s32.totalorder %s44, %s45
    %p57 = scmp.eq.s32.totalorder %s14, 1
    %p58 = por %p56, %p57
    %p60 = scmp.ne.s32.totalorder %s45, %s59
    %p61 = scmp.eq.s32.totalorder %s14, 0
    %p62 = por %p60, %p61
    %s63 = ssub.s32 %s8, %s15
    %p64 = scmp.eq.s32.totalorder %s63, 0
    %s66 = sadd.s32 %s65, 1
    %s67 = scalar_select %p64, %s65, %s66
    %p70 = pneg %p64
    %p71 = scmp.eq.s32.totalorder %s8, 1
    %p72 = por %p70, %p71
    %p73 = scmp.ne.s32.totalorder %s65, %s68
    %p74 = scmp.eq.s32.totalorder %s8, 0
    %p75 = por %p73, %p74
    %p76 = scmp.ne.s32.totalorder %s65, %s68
    %p77 = scmp.eq.s32.totalorder %s13, 1
    %p78 = por %p76, %p77
    %p79 = scmp.ne.s32.totalorder %s68, %s69
    %p80 = scmp.eq.s32.totalorder %s13, 0
    %p81 = por %p79, %p80
    %p82 = scmp.ne.s32.totalorder %s68, %s69
    %p83 = scmp.eq.s32.totalorder %s14, 1
    %p84 = por %p82, %p83
    %p86 = scmp.ne.s32.totalorder %s69, %s85
    %p87 = scmp.eq.s32.totalorder %s14, 0
    %p88 = por %p86, %p87
    %p89 = scmp.le.s32.totalorder 1, %s8
    %p90 = scmp.lt.s32.totalorder %s8, 3
    %p91 = pnand %p89, %p90
    %p92 = pneg %p91
    // Predicated region
    $region9: #{_forward.1} parent=5 // pred_check
      _
    $region10: #{_forward.1} parent=5 // pred_check_branch
      %94 = sbr.rel (%p91) target = $region12
    $region11: #{_forward.1} parent=5 // pred_region
      %s95 = ssub.s32 %s8, 1
      // Predicated region
      $region13: #{_forward.1} parent=11 // pred_check
        %p96 = pneg %p55
      $region14: #{_forward.1} parent=11 // pred_check_branch
        %98 = sbr.rel (%p96) target = $region16
      $region15: #{_forward.1} parent=11 // pred_region
        _
      $region16: #{_forward.1} parent=11 // pred_fallthru
        _
    $region12: #{_forward.1} parent=5 // pred_fallthru
      _
    %p99 = scmp.lt.s32.totalorder %s8, 2
    // Predicated region
    $region17: #{_forward.1} parent=5 // pred_check
      %p100 = pneg %p99
    $region18: #{_forward.1} parent=5 // pred_check_branch
      %102 = sbr.rel (%p100) target = $region20
    $region19: #{_forward.1} parent=5 // pred_region
      // Predicated region
      $region21: #{_forward.1} parent=19 // pred_check
        %p103 = pneg %p28
      $region22: #{_forward.1} parent=19 // pred_check_branch
        %105 = sbr.rel (%p103) target = $region24
      $region23: #{_forward.1} parent=19 // pred_region
        %s106 = smul.u32 4, %s8
        %p107 = scmp.lt.s32.totalorder %s106, 7
        %s108 = scalar_select %p107, %s106, 7
        %s109 = smul.addr %s108, 8
        %s110 = scalar_lea.vmem %s0, %s109
        %s111 = smul.u32 4, %s8
      $region24: #{_forward.1} parent=19 // pred_fallthru
        _
    $region20: #{_forward.1} parent=5 // pred_fallthru
      _
    %p112 = scmp.le.s32.totalorder 1, %s8
    %p113 = scmp.lt.s32.totalorder %s8, 3
    %p114 = pnand %p112, %p113
    %p115 = pneg %p114
    // Predicated region
    $region25: #{_forward.1} parent=5 // pred_check
      _
    $region26: #{_forward.1} parent=5 // pred_check_branch
      %117 = sbr.rel (%p114) target = $region28
    $region27: #{_forward.1} parent=5 // pred_region
      %s118 = ssub.s32 %s8, 1
      %s119 = smul.u32 4, %s13
      %p120 = scmp.lt.s32.totalorder %s119, 7
      %s121 = scalar_select %p120, %s119, 7
      %s122 = smul.addr %s121, 8
      %s123 = scalar_lea.vmem %s0, %s122
      %p124 = pneg %p34
      %p125 = pneg %p31
      %p126 = pneg %p55
      %p127 = pneg %p52
      %p128 = pneg %p81
      %p129 = pneg %p78
      %s130 = smul.u32 4, %s13
      %p131 = scmp.lt.s32.totalorder %s130, 7
      %s132 = scalar_select %p131, %s130, 7
      %s133 = smul.addr %s132, 8
      %s134 = scalar_lea.vmem %s2, %s133
      %s135 = smul.u32 4, %s13
      %p136 = scmp.lt.s32.totalorder %s135, 7
      %s137 = scalar_select %p136, %s135, 7
      %s138 = smul.addr %s137, 8
      %s139 = scalar_lea.vmem %s0, %s138
      %s140 = smul.u32 4, %s13
      %s141 = smul.u32 4, %s13
      %p142 = scmp.lt.s32.totalorder %s141, 7
      %s143 = scalar_select %p142, %s141, 7
      %s144 = smul.addr %s143, 8
      %s145 = scalar_lea.vmem %s2, %s144
      %s146 = smul.u32 4, %s13
      %v147 = vld [vmem:[%s139] sm:$0xff]
      %v148 = vld [vmem:[%s139 + $0x8] sm:$0xff]
      %v149 = vld [vmem:[%s139 + $0x10] sm:$0xff]
      %v150 = vld [vmem:[%s139 + $0x18] sm:$0xff]
      %v151 = vld [vmem:[%s1] sm:$0xff]
      %v152 = vld [vmem:[%s1 + $0x8] sm:$0xff]
      %v153 = vld [vmem:[%s1 + $0x10] sm:$0xff]
      %v154 = vld [vmem:[%s1 + $0x18] sm:$0xff]
      %v155 = vld [vmem:[%s1 + $0x20] sm:$0xff]
      %v156 = vld [vmem:[%s1 + $0x28] sm:$0xff]
      %v157 = vld [vmem:[%s1 + $0x30] sm:$0xff]
      %v158 = vld [vmem:[%s1 + $0x38] sm:$0xff]
      %v159 = vld [vmem:[%s1 + $0x40] sm:$0xff]
      %v160 = vld [vmem:[%s1 + $0x48] sm:$0xff]
      %v161 = vld [vmem:[%s1 + $0x50] sm:$0xff]
      %v162 = vld [vmem:[%s1 + $0x58] sm:$0xff]
      %v163 = vld [vmem:[%s1 + $0x60] sm:$0xff]
      %v164 = vld [vmem:[%s1 + $0x68] sm:$0xff]
      %v165 = vld [vmem:[%s1 + $0x70] sm:$0xff]
      %v166 = vld [vmem:[%s1 + $0x78] sm:$0xff]
      %167 = vmatprep.subr.mxu0 0.0
      %168 = vmatpush1.msra.mxu0 %v151
      %169 = vmatprep.subr.mxu0 0.0
      %170 = vmatpush1.msra.mxu0 %v152
      %171 = vmatprep.subr.mxu0 0.0
      %172 = vmatpush1.msra.mxu0 %v153
      %173 = vmatprep.subr.mxu0 0.0
      %174 = vmatpush1.msra.mxu0 %v154
      %175 = vmatprep.subr.mxu0 0.0
      %176 = vmatpush1.msra.mxu0 %v155
      %177 = vmatprep.subr.mxu0 0.0
      %178 = vmatpush1.msra.mxu0 %v156
      %179 = vmatprep.subr.mxu0 0.0
      %180 = vmatpush1.msra.mxu0 %v157
      %181 = vmatprep.subr.mxu0 0.0
      %182 = vmatpush1.msra.mxu0 %v158
      %183 = vmatprep.subr.mxu0 0.0
      %184 = vmatpush1.msra.mxu0 %v159
      %185 = vmatprep.subr.mxu0 0.0
      %186 = vmatpush1.msra.mxu0 %v160
      %187 = vmatprep.subr.mxu0 0.0
      %188 = vmatpush1.msra.mxu0 %v161
      %189 = vmatprep.subr.mxu0 0.0
      %190 = vmatpush1.msra.mxu0 %v162
      %191 = vmatprep.subr.mxu0 0.0
      %192 = vmatpush1.msra.mxu0 %v163
      %193 = vmatprep.subr.mxu0 0.0
      %194 = vmatpush1.msra.mxu0 %v164
      %195 = vmatprep.subr.mxu0 0.0
      %196 = vmatpush1.msra.mxu0 %v165
      %197 = vmatprep.subr.mxu0 0.0
      %198 = vmatpush1.msra.mxu0 %v166
      %199 = vmatprep.subr.mxu0 0.0
      %200 = vmatpush1.msra.mxu0 0.0
      %201 = vmatprep.subr.mxu0 0.0
      %202 = vmatpush1.msra.mxu0 0.0
      %203 = vmatprep.subr.mxu0 0.0
      %204 = vmatpush1.msra.mxu0 0.0
      %205 = vmatprep.subr.mxu0 0.0
      %206 = vmatpush1.msra.mxu0 0.0
      %207 = vmatprep.subr.mxu0 0.0
      %208 = vmatpush1.msra.mxu0 0.0
      %209 = vmatprep.subr.mxu0 0.0
      %210 = vmatpush1.msra.mxu0 0.0
      %211 = vmatprep.subr.mxu0 0.0
      %212 = vmatpush1.msra.mxu0 0.0
      %213 = vmatprep.subr.mxu0 0.0
      %214 = vmatpush1.msra.mxu0 0.0
      %215 = vmatprep.subr.mxu0 0.0
      %216 = vmatpush1.msra.mxu0 0.0
      %217 = vmatprep.subr.mxu0 0.0
      %218 = vmatpush1.msra.mxu0 0.0
      %219 = vmatprep.subr.mxu0 0.0
      %220 = vmatpush1.msra.mxu0 0.0
      %221 = vmatprep.subr.mxu0 0.0
      %222 = vmatpush1.msra.mxu0 0.0
      %223 = vmatprep.subr.mxu0 0.0
      %224 = vmatpush1.msra.mxu0 0.0
      %225 = vmatprep.subr.mxu0 0.0
      %226 = vmatpush1.msra.mxu0 0.0
      %227 = vmatprep.subr.mxu0 0.0
      %228 = vmatpush1.msra.mxu0 0.0
      %229 = vmatprep.subr.mxu0 0.0
      %230 = vmatpush1.msra.mxu0 0.0
      %231 = vmatprep.mubr.f32.mxu0 0.0
      %232 = vmatmul.mubr.f32.gmra.mrb[0].mxu0 %v147
      %v233 = vpop.f32.mrb[0].mxu0
      %v234 = vadd.f32 0.0, %v233
      %v235 = vpop.f32.mrb[0].mxu0
      %236 = vmatprep.mubr.f32.mxu0 0.0
      %237 = vmatmul.mubr.f32.gmra.mrb[0].mxu0 %v148
      %v238 = vpop.f32.mrb[0].mxu0
      %v239 = vadd.f32 0.0, %v238
      %v240 = vpop.f32.mrb[0].mxu0
      %241 = vmatprep.mubr.f32.mxu0 0.0
      %242 = vmatmul.mubr.f32.gmra.mrb[0].mxu0 %v149
      %v243 = vpop.f32.mrb[0].mxu0
      %v244 = vadd.f32 0.0, %v243
      %v245 = vpop.f32.mrb[0].mxu0
      %246 = vmatprep.mubr.f32.mxu0 0.0
      %247 = vmatmul.mubr.f32.gmra.mrb[0].mxu0 %v150
      %v248 = vpop.f32.mrb[0].mxu0
      %v249 = vadd.f32 0.0, %v248
      %v250 = vpop.f32.mrb[0].mxu0
      %251 = vdwg.mxu0
      %252 = vst [vmem:[%s145] sm:$0xff] %v234
      %253 = vst [vmem:[%s145 + $0x8] sm:$0xff] %v239
      %254 = vst [vmem:[%s145 + $0x10] sm:$0xff] %v244
      %255 = vst [vmem:[%s145 + $0x18] sm:$0xff] %v249
      %s256 = smul.u32 4, %s13
      %p257 = scmp.lt.s32.totalorder %s256, 7
      %s258 = scalar_select %p257, %s256, 7
      %s259 = smul.addr %s258, 8
      %s260 = scalar_lea.vmem %s2, %s259
      // Predicated region
      $region29: #{_forward.1} parent=27 // pred_check
        %p261 = pneg %p78
      $region30: #{_forward.1} parent=27 // pred_check_branch
        %263 = sbr.rel (%p261) target = $region32
      $region31: #{_forward.1} parent=27 // pred_region
        %s264 = smul.u32 4, %s13
      $region32: #{_forward.1} parent=27 // pred_fallthru
        _
    $region28: #{_forward.1} parent=5 // pred_fallthru
      _
    %p265 = scmp.le.s32.totalorder 2, %s8
    // Predicated region
    $region33: #{_forward.1} parent=5 // pred_check
      %p266 = pneg %p265
    $region34: #{_forward.1} parent=5 // pred_check_branch
      %268 = sbr.rel (%p266) target = $region36
    $region35: #{_forward.1} parent=5 // pred_region
      %s269 = ssub.s32 %s8, 2
      // Predicated region
      $region37: #{_forward.1} parent=35 // pred_check
        %p270 = pneg %p84
      $region38: #{_forward.1} parent=35 // pred_check_branch
        %272 = sbr.rel (%p270) target = $region40
      $region39: #{_forward.1} parent=35 // pred_region
        %s273 = smul.u32 4, %s14
        %p274 = scmp.lt.s32.totalorder %s273, 7
        %s275 = scalar_select %p274, %s273, 7
        %s276 = smul.addr %s275, 8
        %s277 = scalar_lea.vmem %s2, %s276
      $region40: #{_forward.1} parent=35 // pred_fallthru
        _
    $region36: #{_forward.1} parent=5 // pred_fallthru
      _
  $region6: #{_forward.1} parent=0 // loop_footer
    %s12 = sadd.s32 1, %s8
  $region7: #{_forward.1} parent=0 // loop_footer_branch
    %7 = sbr.rel target = $region3
  $region8: #{_forward.1} parent=0 // loop_exit
    _

</llo_original>
